<compile_context>
chip_gen: v7x
topology: tpu7x:2x2x1
jax: 0.10.0
libtpu: 0.0.40
codegen_flags: <defaults>
</compile_context>

<pallas_src>
import jax
import jax.numpy as jnp
import numpy as np
from jax.experimental import pallas as pl
from jax.experimental.pallas import tpu as pltpu


def _round_up(x, m):
    return ((x + m - 1) // m) * m


def _vmem_capacity_bytes():
    try:
        return int(pltpu.get_tpu_info().vmem_capacity_bytes)
    except Exception:
        return 64 * 1024 * 1024      # conservative fallback (v7x per-TC VMEM)


def _vmem_limit_bytes():
    # ~25% headroom for compiler-internal scratch / double buffers, <= 100 MiB.
    return int(min(100 * 1024 * 1024, (_vmem_capacity_bytes() * 3) // 4))


# ---------------------------------------------------------------------------
# pltpu.roll direction probe: we want np.roll semantics (result[i] = x[i - k]).
# Determined once, eagerly, with a tiny kernel so kernel B is robust either way.
_ROLL_MATCHES_NP = None


def _probe_roll_direction():
    global _ROLL_MATCHES_NP
    if _ROLL_MATCHES_NP is None:
        def k(x_ref, o_ref):
            o_ref[...] = pltpu.roll(x_ref[...], 1, 0)

        x = jnp.arange(8 * 128, dtype=jnp.float32).reshape(8, 128)
        y = pl.pallas_call(k, out_shape=jax.ShapeDtypeStruct((8, 128), jnp.float32))(x)
        if bool(jnp.array_equal(y, jnp.roll(x, 1, axis=0))):
            _ROLL_MATCHES_NP = True
        elif bool(jnp.array_equal(y, jnp.roll(x, -1, axis=0))):
            _ROLL_MATCHES_NP = False
        else:
            raise RuntimeError("unexpected pltpu.roll semantics")
    return _ROLL_MATCHES_NP


def _roll_rows(x, k, matches_np):
    """result[i] = x[(i - k) mod n] along axis 0 (np.roll semantics)."""
    n = x.shape[0]
    k = k % n
    if k == 0:
        return x
    return pltpu.roll(x, k if matches_np else n - k, 0)


# ----------------------------- Kernel A -------------------------------------
# Fused: BN1 scale/shift + ReLU + 1x1 conv  == (tm, Cin) @ (Cin, C1pad), bf16
# operands / f32 accumulation, plus per-tile BN2 partial statistics
# (sum, sum-of-squares) emitted as lane/sublane-aligned (1, 8, C1pad) blocks.
def _make_bn_relu_conv1x1_kernel(m_true, tm):
    need_mask = (m_true % tm) != 0

    def kernel(x_ref, scale_ref, shift_ref, w_ref, o_ref, sum_ref, ssq_ref):
        # BN1 scale/shift + ReLU in f32 (v5e VPU has no bf16 path);
        # cast to bf16 only for the MXU operand.
        a = jnp.maximum(x_ref[...] * scale_ref[...] + shift_ref[...], 0.0)
        h = jnp.dot(a.astype(jnp.bfloat16), w_ref[...],
                    preferred_element_type=jnp.float32)          # (tm, C1p) f32
        o_ref[...] = h.astype(o_ref.dtype)                       # bf16 to HBM

        if need_mask:
            # rows beyond m_true are zero-padding; exclude from the statistics
            row = pl.program_id(0) * tm + jax.lax.broadcasted_iota(
                jnp.int32, (tm, 1), 0)
            h = jnp.where(row < m_true, h, 0.0)

        # Per-tile partial BN2 stats kept sublane-shaped (8, C1p): the
        # (tm, C1p) -> (tm//8, 8, C1p) reshape matches the sublane tiling.
        part = h.reshape(tm // 8, 8, h.shape[-1])
        sum_ref[0] = jnp.sum(part, axis=0)
        ssq_ref[0] = jnp.sum(part * part, axis=0)

    return kernel


def bn_relu_conv1x1_stats(x_flat, scale, shift, w_bf16, *, tm=None):
    m, cin = x_flat.shape
    c1p = w_bf16.shape[1]

    if tm is None:
        # bigger tiles on 128-MiB-VMEM parts (v5e/v6e); stay modest on v7x.
        tm = 1024 if _vmem_capacity_bytes() >= (100 << 20) else 512
    tm_eff = min(tm, _round_up(m, 16))          # multiple of 16 (bf16 sublanes)
    m_pad = _round_up(m, tm_eff)
    x_p = x_flat if m_pad == m else jnp.pad(x_flat, ((0, m_pad - m), (0, 0)))
    n_tiles = m_pad // tm_eff

    out_shape = (
        jax.ShapeDtypeStruct((m_pad, c1p), jnp.bfloat16),        # h
        jax.ShapeDtypeStruct((n_tiles, 8, c1p), jnp.float32),    # partial sum(h)
        jax.ShapeDtypeStruct((n_tiles, 8, c1p), jnp.float32),    # partial sum(h^2)
    )
    h_pad, hsum, hssq = pl.pallas_call(
        _make_bn_relu_conv1x1_kernel(m, tm_eff),
        out_shape=out_shape,
        grid_spec=pltpu.PrefetchScalarGridSpec(
            num_scalar_prefetch=0,
            grid=(n_tiles,),
            in_specs=[
                pl.BlockSpec((tm_eff, cin), lambda i: (i, 0)),
                pl.BlockSpec((1, cin), lambda i: (0, 0)),
                pl.BlockSpec((1, cin), lambda i: (0, 0)),
                pl.BlockSpec((cin, c1p), lambda i: (0, 0)),
            ],
            out_specs=(
                pl.BlockSpec((tm_eff, c1p), lambda i: (i, 0)),
                pl.BlockSpec((1, 8, c1p), lambda i: (i, 0, 0)),
                pl.BlockSpec((1, 8, c1p), lambda i: (i, 0, 0)),
            ),
        ),
        compiler_params=pltpu.CompilerParams(
            dimension_semantics=("parallel",),          # per-tile stats -> megacore-safe
            vmem_limit_bytes=_vmem_limit_bytes(),
        ),
    )(x_p, scale, shift, w_bf16)

    return h_pad[:m], hsum, hssq


# ----------------------------- Kernel B -------------------------------------
# Fused: BN2 scale/shift + ReLU + 3x3 conv (padding=1) on a flattened (H*W, C)
# view.  kw shifts = sublane rotations + column masks (im2col -> K=3*C1p);
# kh shifts = rotations by +/-W with row masks.  Three bf16 matmuls, f32 acc,
# single lane-dense store.
def _make_bn_relu_conv3x3_kernel(height, width, roll_matches_np):
    hw = height * width

    def kernel(h_ref, scale_ref, shift_ref, w_ref, o_ref):
        # BN2 scale/shift + ReLU in f32.
        a = jnp.maximum(h_ref[0].astype(jnp.float32) * scale_ref[...]
                        + shift_ref[...], 0.0)                    # (HW, C1p)

        idx = jax.lax.broadcasted_iota(jnp.int32, (hw, 1), 0)
        col = idx % width

        # width (kw) shifts: XLU rotation + edge masks (no misaligned slices)
        a_l = jnp.where(col == 0, 0.0, _roll_rows(a, 1, roll_matches_np))
        a_r = jnp.where(col == width - 1, 0.0, _roll_rows(a, -1, roll_matches_np))
        a_kw = jnp.concatenate([a_l, a, a_r], axis=-1)            # (HW, 3*C1p)

        # height (kh) shifts of the im2col'd rows
        a_up = jnp.where(idx < width, 0.0,
                         _roll_rows(a_kw, width, roll_matches_np))
        a_dn = jnp.where(idx >= hw - width, 0.0,
                         _roll_rows(a_kw, -width, roll_matches_np))

        bf = jnp.bfloat16
        acc = jnp.dot(a_up.astype(bf), w_ref[0], preferred_element_type=jnp.float32)
        acc = acc + jnp.dot(a_kw.astype(bf), w_ref[1], preferred_element_type=jnp.float32)
        acc = acc + jnp.dot(a_dn.astype(bf), w_ref[2], preferred_element_type=jnp.float32)
        o_ref[0] = acc.astype(o_ref.dtype)

    return kernel


def bn_relu_conv3x3(h3, scale2, shift2, w2r, *, height, width):
    # h3: (N, H*W, C1p) bf16 ; w2r: (3, 3*C1p, Coutp) bf16, rows ordered [kw0|kw1|kw2]
    n, hw, c1p = h3.shape
    coutp = w2r.shape[-1]
    assert hw % 8 == 0, "H*W must be a multiple of 8"
    return pl.pallas_call(
        _make_bn_relu_conv3x3_kernel(height, width, _probe_roll_direction()),
        out_shape=jax.ShapeDtypeStruct((n, hw, coutp), jnp.float32),
        grid_spec=pltpu.PrefetchScalarGridSpec(
            num_scalar_prefetch=0,
            grid=(n,),
            in_specs=[
                pl.BlockSpec((1, hw, c1p), lambda i: (i, 0, 0)),
                pl.BlockSpec((1, c1p), lambda i: (0, 0)),
                pl.BlockSpec((1, c1p), lambda i: (0, 0)),
                pl.BlockSpec((3, 3 * c1p, coutp), lambda i: (0, 0, 0)),
            ],
            out_specs=pl.BlockSpec((1, hw, coutp), lambda i: (i, 0, 0)),
        ),
        compiler_params=pltpu.CompilerParams(
            dimension_semantics=("parallel",),
            vmem_limit_bytes=_vmem_limit_bytes(),
        ),
    )(h3, scale2, shift2, w2r)


# ----------------------------- Module wrapper --------------------------------
def init_bottleneck_params(key, in_planes, growth_rate):
    c1 = 4 * growth_rate
    k = jax.random.split(key, 6)
    return {
        "bn1_gamma": jax.random.normal(k[0], (in_planes,), jnp.float32) * 0.1 + 1.0,
        "bn1_beta":  jax.random.normal(k[1], (in_planes,), jnp.float32) * 0.1,
        "conv1_w":   jax.random.normal(k[2], (c1, in_planes, 1, 1), jnp.float32) * 0.1,
        "bn2_gamma": jax.random.normal(k[3], (c1,), jnp.float32) * 0.1 + 1.0,
        "bn2_beta":  jax.random.normal(k[4], (c1,), jnp.float32) * 0.1,
        "conv2_w":   jax.random.normal(k[5], (growth_rate, c1, 3, 3), jnp.float32) * 0.1,
    }


def _bn_scale_shift(x_nhwc, gamma, beta, eps=1e-5):
    # training-mode BatchNorm2d: per-channel batch mean / biased variance
    mean = jnp.mean(x_nhwc, axis=(0, 1, 2))
    var = jnp.mean((x_nhwc - mean) ** 2, axis=(0, 1, 2))
    scale = gamma / jnp.sqrt(var + eps)
    shift = beta - mean * scale
    return scale.reshape(1, -1), shift.reshape(1, -1)


def bottleneck_forward(params, x_nchw, eps=1e-5):
    N, Cin, H, W = x_nchw.shape
    x = jnp.transpose(x_nchw, (0, 2, 3, 1))             # NCHW -> NHWC
    M = N * H * W

    c1 = params["conv1_w"].shape[0]
    growth = params["conv2_w"].shape[0]
    c1p = _round_up(c1, 128)                            # lane-dense conv1 out chans
    coutp = _round_up(growth, 128)                      # lane-dense conv2 out chans

    # --- bn1 + relu + conv1 (1x1), with fused per-tile BN2 statistics ---
    s1, b1 = _bn_scale_shift(x, params["bn1_gamma"], params["bn1_beta"], eps)
    w1 = params["conv1_w"][:, :, 0, 0].T                # (Cin, C1)
    w1p = jnp.pad(w1, ((0, 0), (0, c1p - c1))).astype(jnp.bfloat16)
    h_flat, hsum, hssq = bn_relu_conv1x1_stats(x.reshape(M, Cin), s1, b1, w1p)

    # finish BN2 batch stats (biased variance) from the per-tile partial sums
    sum2 = jnp.sum(hsum, axis=(0, 1))
    ssq2 = jnp.sum(hssq, axis=(0, 1))
    mean2 = sum2 / M
    var2 = jnp.maximum(ssq2 / M - mean2 * mean2, 0.0)
    g2 = jnp.pad(params["bn2_gamma"], (0, c1p - c1))
    b2 = jnp.pad(params["bn2_beta"], (0, c1p - c1))
    scale2 = g2 / jnp.sqrt(var2 + eps)
    shift2 = b2 - mean2 * scale2

    # --- bn2 + relu + conv2 (3x3, pad 1) ---
    w2t = jnp.transpose(params["conv2_w"], (2, 3, 1, 0))          # (3,3,C1,growth)
    w2p = jnp.pad(w2t, ((0, 0), (0, 0), (0, c1p - c1), (0, coutp - growth)))
    w2r = w2p.reshape(3, 3 * c1p, coutp).astype(jnp.bfloat16)     # rows: [kw0|kw1|kw2]
    h3 = h_flat.reshape(N, H * W, c1p)
    out = bn_relu_conv3x3(h3, scale2.reshape(1, -1), shift2.reshape(1, -1),
                          w2r, height=H, width=W)
    out = out.reshape(N, H, W, coutp)[..., :growth]

    # --- concat([out, x], channel) + back to NCHW ---  (XLA glue)
    # TODO(synk): fold this concat and the NHWC<->NCHW transposes into the
    #             kernels' output index maps to remove the extra HBM passes.
    cat = jnp.concatenate([out, x], axis=-1)
    return jnp.transpose(cat, (0, 3, 1, 2))              # NHWC -> NCHW


# --------------------------- pure-JAX reference -------------------------------
def _reference(params, x_nchw):
    eps = 1e-5
    x = x_nchw
    mean = jnp.mean(x, axis=(0, 2, 3), keepdims=True)
    var = jnp.mean((x - mean) ** 2, axis=(0, 2, 3), keepdims=True)
    g = params["bn1_gamma"].reshape(1, -1, 1, 1)
    b = params["bn1_beta"].reshape(1, -1, 1, 1)
    a = jax.nn.relu((x - mean) / jnp.sqrt(var + eps) * g + b)
    h = jax.lax.conv_general_dilated(a, params["conv1_w"], (1, 1), "VALID",
                                     dimension_numbers=("NCHW", "OIHW", "NCHW"))
    mean = jnp.mean(h, axis=(0, 2, 3), keepdims=True)
    var = jnp.mean((h - mean) ** 2, axis=(0, 2, 3), keepdims=True)
    g = params["bn2_gamma"].reshape(1, -1, 1, 1)
    b = params["bn2_beta"].reshape(1, -1, 1, 1)
    a = jax.nn.relu((h - mean) / jnp.sqrt(var + eps) * g + b)
    out = jax.lax.conv_general_dilated(a, params["conv2_w"], (1, 1),
                                       ((1, 1), (1, 1)),
                                       dimension_numbers=("NCHW", "OIHW", "NCHW"))
    return jnp.concatenate([out, x], axis=1)


if __name__ == "__main__":
    key = jax.random.PRNGKey(0)
    k_x, k_p = jax.random.split(key)

    in_planes, growth_rate = 4, 4
    N, H, W = 2, 16, 16
    x = jax.random.normal(k_x, (N, in_planes, H, W), jnp.float32)
    params = init_bottleneck_params(k_p, in_planes, growth_rate)

    _probe_roll_direction()                    # prime the roll-direction cache (eager)

    y = jax.block_until_ready(bottleneck_forward(params, x))
    assert y.shape == (N, growth_rate + in_planes, H, W), y.shape

    y_ref = jax.block_until_ready(_reference(params, x))
    # bf16 MXU operands (f32 accumulation) -> compare at bf16-level tolerance
    np.testing.assert_allclose(np.asarray(y), np.asarray(y_ref),
                               atol=5e-2, rtol=5e-2)

    print("KERNEL_OK")
</pallas_src>

<mosaic_0001>
module attributes {stable_mosaic.version = 11 : i64} {
  func.func @k(%arg0: memref<8x128xf32, #tpu.memory_space<vmem>>, %arg1: memref<8x128xf32, #tpu.memory_space<vmem>>) attributes {dimension_semantics = [], scalar_prefetch = 0 : i64, scratch_operands = 0 : i64, tpu.core_type = #tpu.core_type<tc>} {
    %c0 = arith.constant 0 : index
    %c0_0 = arith.constant 0 : index
    %0 = vector.load %arg0[%c0, %c0_0] : memref<8x128xf32, #tpu.memory_space<vmem>>, vector<8x128xf32>
    %c1_i32 = arith.constant 1 : i32
    %1 = tpu.dynamic_rotate %0 by %c1_i32 dim 0 : vector<8x128xf32>, i32 -> vector<8x128xf32>
    %c0_1 = arith.constant 0 : index
    %c0_2 = arith.constant 0 : index
    %2 = vector.load %arg1[%c0_1, %c0_2] : memref<8x128xf32, #tpu.memory_space<vmem>>, vector<8x128xf32>
    tpu.vector_store %arg1[%c0_1, %c0_2], %1 {strides = array<i32>} : memref<8x128xf32, #tpu.memory_space<vmem>>, vector<8x128xf32>,
    return
  }
}

</mosaic_0001>

<llo_original>
// kernel: tpu_custom_call.1
$region0: #{tpu_custom_call.1}
  #allocation0 [shape = 'u32[]', space=smem, size = 0x4, offset = 0x4, fixed_abs, tag = 'smem constant byte address 0x4 - core index']
  #allocation1 [shape = 'u32[144,128]{1,0:T(1,128)}', space=vmem, size = 0x12000, scoped, tag = 'internal scratch']
  %s0 = inlined_call_operand.hbm [shape: f32[8,128], index: 0, kind: input, shape index: {}]
  %s1 = inlined_call_operand.hbm [shape: f32[8,128], index: 1, kind: output, shape index: {}]
  %s2 = sld [smem:[#allocation0]]
  $region18: #{tpu_custom_call.1} parent=0
    _
  %s4 = ssub.s32 1, %s2
  %s5 = scalar_select 0, %s4, %s2
  $region1: #{tpu_custom_call.1} parent=0
    #allocation2 [shape = 'u8[4096]{0}', space=vmem, size = 0x1000, scoped, tag = 'input window, operand 0, single buffered']
    #allocation3 [shape = 's32[1]{0}', space=sflag, size = 0x4, scoped, tag = 'scoped memory for tpu_custom_call.1']
    #allocation4 [shape = 's32[1]{0}', space=sflag, size = 0x4, scoped, tag = 'scoped memory for tpu_custom_call.1']
    #allocation5 [shape = 'u8[4096]{0}', space=vmem, size = 0x1000, scoped, tag = 'output window, operand 0, single buffered']
    %6 = vsyncpa [#allocation3], 0
    %7 = vsyncpa [#allocation4], 0
    // Predicated region
    $region2: #{tpu_custom_call.1} parent=1 // pred_check
      _
    $region3: #{tpu_custom_call.1} parent=1 // pred_check_branch
      %9 = sbr.rel (0) target = $region5
    $region4: #{tpu_custom_call.1} parent=1 // pred_region
      %s11 = ssub.s32 128, 128
      %12 = vsyncadd [#allocation3], %s11
      %s14 = sshll.u32 [#allocation2], 4
      %s15 = int_to_ptr.vmem [resolvable:$true] %s14
      %17 = dma.hbm_to_vmem [thread:$0]  %s0, 128, %s15, [#allocation3]
    $region5: #{tpu_custom_call.1} parent=1 // pred_fallthru
      _
    // Predicated region
    $region6: #{tpu_custom_call.1} parent=1 // pred_check
      _
    $region7: #{tpu_custom_call.1} parent=1 // pred_check_branch
      %19 = sbr.rel (0) target = $region9
    $region8: #{tpu_custom_call.1} parent=1 // pred_region
      %20 = dma.done [#allocation3], 128
    $region9: #{tpu_custom_call.1} parent=1 // pred_fallthru
      _
    %v21 = vld [vmem:[#allocation2] sm:$0xff]
    %v22 = vrot.slane %v21, 7
    %23 = vst [vmem:[#allocation5] sm:$0xff] %v22
    // Predicated region
    $region10: #{tpu_custom_call.1} parent=1 // pred_check
      _
    $region11: #{tpu_custom_call.1} parent=1 // pred_check_branch
      %25 = sbr.rel (0) target = $region13
    $region12: #{tpu_custom_call.1} parent=1 // pred_region
      %s27 = ssub.s32 128, 128
      %28 = vsyncadd [#allocation4], %s27
      %s30 = sshll.u32 [#allocation5], 4
      %s31 = int_to_ptr.vmem [resolvable:$true] %s30
      %33 = dma.vmem_to_hbm [thread:$0]  %s31, 128, %s1, [#allocation4]
    $region13: #{tpu_custom_call.1} parent=1 // pred_fallthru
      _
    // Predicated region
    $region14: #{tpu_custom_call.1} parent=1 // pred_check
      _
    $region15: #{tpu_custom_call.1} parent=1 // pred_check_branch
      %35 = sbr.rel (0) target = $region17
    $region16: #{tpu_custom_call.1} parent=1 // pred_region
      %36 = dma.done [#allocation4], 128
    $region17: #{tpu_custom_call.1} parent=1 // pred_fallthru
      _
    %37 = vsyncpa [#allocation3], 1
    %38 = vsyncpa [#allocation4], 1

</llo_original>
